<compile_context>
chip_gen: v7x
topology: tpu7x:2x2x1
jax: 0.10.0
libtpu: 0.0.40
codegen_flags: <defaults>
</compile_context>

<pallas_src>
import functools

import jax
import jax.numpy as jnp
from jax.experimental import pallas as pl
from jax.experimental.pallas import tpu as pltpu

_LANE = 128
_FUSED_MAX_NODES = 512  # keep the one-hot gather path for small tables only


def _round_up(x, m):
    return (x + m - 1) // m * m


# ---------------------------------------------------------------------------
# Kernel 1: fused gather (embedding table resident in VMEM, one-hot matmul).
# ---------------------------------------------------------------------------
def _fused_score_kernel(node_id_ref, neigh_id_ref, emb_t_ref, bias_ref, out_ref):
    # node_id_ref, neigh_id_ref : (1, TB) int32  lane-dense id tiles
    # emb_t_ref                 : (D, N)         resident transposed table
    # bias_ref                  : (N, 1) f32     resident bias column
    # out_ref                   : (1, TB) f32    lane-dense probabilities
    n_node = emb_t_ref.shape[1]
    tb = out_ref.shape[1]

    emb_t = emb_t_ref[...].astype(jnp.float32)                      # (D, N)

    row_ids = jax.lax.broadcasted_iota(jnp.int32, (n_node, tb), 0)  # (N, TB)
    oh_a = (row_ids == node_id_ref[...]).astype(jnp.float32)        # (N, TB)
    oh_b = (row_ids == neigh_id_ref[...]).astype(jnp.float32)       # (N, TB)

    # Gather rows via MXU: (D, N) @ (N, TB) -> (D, TB), lane-dense.
    a_t = jnp.dot(emb_t, oh_a, preferred_element_type=jnp.float32)  # (D, TB)
    b_t = jnp.dot(emb_t, oh_b, preferred_element_type=jnp.float32)  # (D, TB)

    # bias[neighbor] gathered with the same one-hot (VPU mul + sublane reduce).
    nb = jnp.sum(oh_b * bias_ref[...].astype(jnp.float32),
                 axis=0, keepdims=True)                             # (1, TB)

    score = jnp.sum(a_t * b_t, axis=0, keepdims=True) + nb          # (1, TB)
    out_ref[...] = jax.nn.sigmoid(score)


# ---------------------------------------------------------------------------
# Kernel 2: streamed fallback (pre-gathered, transposed (D, TB) tiles).
# ---------------------------------------------------------------------------
def _streamed_score_kernel(node_emb_t_ref, neigh_emb_t_ref, bias_ref, out_ref):
    # node_emb_t_ref, neigh_emb_t_ref : (D, TB) source-dtype tiles
    # bias_ref                        : (1, TB) f32
    # out_ref                         : (1, TB) f32
    a = node_emb_t_ref[...].astype(jnp.float32)
    b = neigh_emb_t_ref[...].astype(jnp.float32)
    score = jnp.sum(a * b, axis=0, keepdims=True) + bias_ref[...].astype(jnp.float32)
    out_ref[...] = jax.nn.sigmoid(score)


# ---------------------------------------------------------------------------
# Tile-size selection (all static Python math on shapes).
# ---------------------------------------------------------------------------
def _fused_tile_cap(n_node, d):
    budget = 2 * 1024 * 1024  # bytes per (n_node, TB) / (D, TB) f32 intermediate
    cap = min(4096, budget // max(4 * n_node, 1), budget // max(8 * d, 1))
    return max(_LANE, cap // _LANE * _LANE)


def _streamed_tile_cap(d, itemsize):
    budget = 4 * 1024 * 1024  # bytes per double-buffered (D, TB) input stream
    cap = min(4096, budget // max(2 * d * itemsize, 1))
    return max(_LANE, cap // _LANE * _LANE)


def _pick_tiling(batch, cap):
    # Keep >= 2 grid steps when the batch allows (v7x has 2 TensorCores),
    # while still using the biggest tile that fits the VMEM budget.
    half = _round_up(max(1, (batch + 1) // 2), _LANE)
    tile_b = max(_LANE, min(cap, half))
    b_pad = _round_up(batch, tile_b)
    return tile_b, b_pad, b_pad // tile_b


_COMPILER_PARAMS = pltpu.CompilerParams(
    dimension_semantics=("parallel",),
    vmem_limit_bytes=32 * 1024 * 1024,
)


# ---------------------------------------------------------------------------
# Public forward: sigmoid(score(node_id, node_neighbor_id))
# ---------------------------------------------------------------------------
@functools.partial(jax.jit, static_argnames=("use_fused",))
def discriminator_forward(embedding_matrix, bias, node_id, node_neighbor_id,
                          use_fused=None):
    """Returns sigmoid(sum(E[a]*E[b], -1) + bias[b]) for each id pair."""
    n_node, d = embedding_matrix.shape
    batch = node_id.shape[0]

    fused = use_fused if use_fused is not None else (n_node <= _FUSED_MAX_NODES)

    emb_t = embedding_matrix.T  # (D, N) — layout plumbing only, no upcast.

    if fused:
        tile_b, b_pad, grid = _pick_tiling(batch, _fused_tile_cap(n_node, d))
        pad = b_pad - batch
        nid = jnp.pad(node_id.astype(jnp.int32), (0, pad)).reshape(1, b_pad)
        nnid = jnp.pad(node_neighbor_id.astype(jnp.int32), (0, pad)).reshape(1, b_pad)
        bias_col = bias.astype(jnp.float32).reshape(n_node, 1)

        prob = pl.pallas_call(
            _fused_score_kernel,
            out_shape=jax.ShapeDtypeStruct((1, b_pad), jnp.float32),
            grid_spec=pltpu.PrefetchScalarGridSpec(
                num_scalar_prefetch=0,
                grid=(grid,),
                in_specs=[
                    pl.BlockSpec((1, tile_b), lambda i: (0, i)),
                    pl.BlockSpec((1, tile_b), lambda i: (0, i)),
                    pl.BlockSpec((d, n_node), lambda i: (0, 0)),   # resident table
                    pl.BlockSpec((n_node, 1), lambda i: (0, 0)),   # resident bias
                ],
                out_specs=pl.BlockSpec((1, tile_b), lambda i: (0, i)),
            ),
            compiler_params=_COMPILER_PARAMS,
        )(nid, nnid, emb_t, bias_col)
    else:
        itemsize = jnp.dtype(embedding_matrix.dtype).itemsize
        tile_b, b_pad, grid = _pick_tiling(batch, _streamed_tile_cap(d, itemsize))
        pad = b_pad - batch
        nid = jnp.pad(node_id.astype(jnp.int32), (0, pad))
        nnid = jnp.pad(node_neighbor_id.astype(jnp.int32), (0, pad))

        # Gathers stay in the source dtype; tiles are transposed so the batch
        # lands on the lane axis.
        node_emb_t = jnp.take(emb_t, nid, axis=1)                    # (D, Bp)
        neigh_emb_t = jnp.take(emb_t, nnid, axis=1)                  # (D, Bp)
        neigh_bias = jnp.take(bias, nnid, axis=0).astype(jnp.float32).reshape(1, b_pad)

        prob = pl.pallas_call(
            _streamed_score_kernel,
            out_shape=jax.ShapeDtypeStruct((1, b_pad), jnp.float32),
            grid_spec=pltpu.PrefetchScalarGridSpec(
                num_scalar_prefetch=0,
                grid=(grid,),
                in_specs=[
                    pl.BlockSpec((d, tile_b), lambda i: (0, i)),
                    pl.BlockSpec((d, tile_b), lambda i: (0, i)),
                    pl.BlockSpec((1, tile_b), lambda i: (0, i)),
                ],
                out_specs=pl.BlockSpec((1, tile_b), lambda i: (0, i)),
            ),
            compiler_params=_COMPILER_PARAMS,
        )(node_emb_t, neigh_emb_t, neigh_bias)

    return prob[0, :batch]


def _reference_forward(embedding_matrix, bias, node_id, node_neighbor_id):
    ne = embedding_matrix[node_id, :].astype(jnp.float32)
    nn_ = embedding_matrix[node_neighbor_id, :].astype(jnp.float32)
    nb = bias[node_neighbor_id].astype(jnp.float32)
    score = jnp.sum(ne * nn_, axis=1) + nb
    return jax.nn.sigmoid(score)


if __name__ == "__main__":
    key = jax.random.PRNGKey(0)
    k_emb, k_ids, k_nids = jax.random.split(key, 3)

    n_node = 64
    emb_dim = 32
    batch = 8

    # Mirrors nn.Parameter(node_emd_init) and bias = zeros(n_node).
    node_emd_init = jax.random.normal(k_emb, (n_node, emb_dim), jnp.float32) * 0.1
    bias = jnp.zeros((n_node,), jnp.float32)

    node_id = jax.random.randint(k_ids, (batch,), 0, n_node, jnp.int32)
    node_neighbor_id = jax.random.randint(k_nids, (batch,), 0, n_node, jnp.int32)

    ref = _reference_forward(node_emd_init, bias, node_id, node_neighbor_id)

    # Default: fused, VMEM-resident table path.
    prob_fused = discriminator_forward(node_emd_init, bias, node_id, node_neighbor_id)
    prob_fused = jax.block_until_ready(prob_fused)
    assert prob_fused.shape == (batch,)
    assert jnp.allclose(prob_fused, ref, atol=1e-5, rtol=1e-5), (prob_fused, ref)

    # Streamed fallback path (used automatically for large node tables).
    prob_str = discriminator_forward(node_emd_init, bias, node_id, node_neighbor_id,
                                     use_fused=False)
    prob_str = jax.block_until_ready(prob_str)
    assert prob_str.shape == (batch,)
    assert jnp.allclose(prob_str, ref, atol=1e-5, rtol=1e-5), (prob_str, ref)

    # TODO(synk): loss()/reward() (BCE + L2 regularization, softplus reward) are
    # training utilities outside the forward pass and are not implemented here.
    print("KERNEL_OK")
</pallas_src>

<mosaic_0001>
module attributes {stable_mosaic.version = 11 : i64} {
  func.func @_fused_score_kernel(%arg0: i32, %arg1: memref<1x128xi32, #tpu.memory_space<vmem>>, %arg2: memref<1x128xi32, #tpu.memory_space<vmem>>, %arg3: memref<32x64xf32, #tpu.memory_space<vmem>>, %arg4: memref<64x1xf32, #tpu.memory_space<vmem>>, %arg5: memref<1x128xf32, #tpu.memory_space<vmem>>) attributes {dimension_semantics = [#tpu.dimension_semantics<parallel>], iteration_bounds = array<i64: 1>, scalar_prefetch = 0 : i64, scratch_operands = 0 : i64, tpu.core_type = #tpu.core_type<tc>, window_params = [{transform_indices = @transform_0, window_bounds = array<i64: 1, 128>}, {transform_indices = @transform_1, window_bounds = array<i64: 1, 128>}, {pipeline_mode = #tpu.pipeline_mode<synchronous>, transform_indices = @transform_2, window_bounds = array<i64: 32, 64>}, {pipeline_mode = #tpu.pipeline_mode<synchronous>, transform_indices = @transform_3, window_bounds = array<i64: 64, 1>}, {transform_indices = @transform_4, window_bounds = array<i64: 1, 128>}]} {
    %c0 = arith.constant 0 : index
    %c0_0 = arith.constant 0 : index
    %0 = vector.load %arg3[%c0, %c0_0] : memref<32x64xf32, #tpu.memory_space<vmem>>, vector<32x64xf32>
    %1 = tpu.iota {dimensions = array<i32: 0>} : vector<64x128xi32>
    %c0_1 = arith.constant 0 : index
    %c0_2 = arith.constant 0 : index
    %2 = vector.load %arg1[%c0_1, %c0_2] : memref<1x128xi32, #tpu.memory_space<vmem>>, vector<1x128xi32>
    %3 = vector.broadcast %2 : vector<1x128xi32> to vector<64x128xi32>
    %4 = arith.cmpi eq, %1, %3 : vector<64x128xi32>
    %5 = arith.extui %4 : vector<64x128xi1> to vector<64x128xi32>
    %6 = arith.sitofp %5 : vector<64x128xi32> to vector<64x128xf32>
    %c0_3 = arith.constant 0 : index
    %c0_4 = arith.constant 0 : index
    %7 = vector.load %arg2[%c0_3, %c0_4] : memref<1x128xi32, #tpu.memory_space<vmem>>, vector<1x128xi32>
    %8 = vector.broadcast %7 : vector<1x128xi32> to vector<64x128xi32>
    %9 = arith.cmpi eq, %1, %8 : vector<64x128xi32>
    %10 = arith.extui %9 : vector<64x128xi1> to vector<64x128xi32>
    %11 = arith.sitofp %10 : vector<64x128xi32> to vector<64x128xf32>
    %cst = arith.constant dense<0.000000e+00> : vector<32x128xf32>
    %12 = tpu.matmul %0, %6, %cst {dimension_numbers = #tpu.dot_dimension_numbers<[1], [0], [0], [1], [0, 0, 1, 1], [], []>} : vector<32x64xf32>, vector<64x128xf32>, vector<32x128xf32> -> vector<32x128xf32>
    %cst_5 = arith.constant dense<0.000000e+00> : vector<32x128xf32>
    %13 = tpu.matmul %0, %11, %cst_5 {dimension_numbers = #tpu.dot_dimension_numbers<[1], [0], [0], [1], [0, 0, 1, 1], [], []>} : vector<32x64xf32>, vector<64x128xf32>, vector<32x128xf32> -> vector<32x128xf32>
    %c0_6 = arith.constant 0 : index
    %c0_7 = arith.constant 0 : index
    %14 = vector.load %arg4[%c0_6, %c0_7] : memref<64x1xf32, #tpu.memory_space<vmem>>, vector<64x1xf32>
    %15 = vector.broadcast %14 : vector<64x1xf32> to vector<64x128xf32>
    %16 = arith.mulf %11, %15 : vector<64x128xf32>
    %cst_8 = arith.constant dense<0.000000e+00> : vector<128xf32>
    %17 = vector.multi_reduction <add>, %16, %cst_8 [0] : vector<64x128xf32> to vector<128xf32>
    %18 = vector.shape_cast %17 : vector<128xf32> to vector<1x128xf32>
    %19 = arith.mulf %12, %13 : vector<32x128xf32>
    %cst_9 = arith.constant dense<0.000000e+00> : vector<128xf32>
    %20 = vector.multi_reduction <add>, %19, %cst_9 [0] : vector<32x128xf32> to vector<128xf32>
    %21 = vector.shape_cast %20 : vector<128xf32> to vector<1x128xf32>
    %22 = arith.addf %21, %18 : vector<1x128xf32>
    %23 = arith.negf %22 : vector<1x128xf32>
    %24 = math.exp %23 : vector<1x128xf32>
    %cst_10 = arith.constant 1.000000e+00 : f32
    %25 = vector.broadcast %cst_10 : f32 to vector<1x128xf32>
    %26 = arith.addf %25, %24 : vector<1x128xf32>
    %27 = arith.divf %25, %26 : vector<1x128xf32>
    %c0_11 = arith.constant 0 : index
    %c0_12 = arith.constant 0 : index
    %28 = vector.load %arg5[%c0_11, %c0_12] : memref<1x128xf32, #tpu.memory_space<vmem>>, vector<1x128xf32>
    tpu.vector_store %arg5[%c0_11, %c0_12], %27 {strides = array<i32>} : memref<1x128xf32, #tpu.memory_space<vmem>>, vector<1x128xf32>,
    return
  }
  func.func @transform_0(%arg0: i32) -> (i32, i32) {
    %c0_i32 = arith.constant 0 : i32
    %c0_i32_0 = arith.constant 0 : i32
    return %c0_i32, %arg0 : i32, i32
  }
  func.func @transform_1(%arg0: i32) -> (i32, i32) {
    %c0_i32 = arith.constant 0 : i32
    %c0_i32_0 = arith.constant 0 : i32
    return %c0_i32, %arg0 : i32, i32
  }
  func.func @transform_2(%arg0: i32) -> (i32, i32) {
    %c0_i32 = arith.constant 0 : i32
    %c0_i32_0 = arith.constant 0 : i32
    %c0_i32_1 = arith.constant 0 : i32
    return %c0_i32, %c0_i32_0 : i32, i32
  }
  func.func @transform_3(%arg0: i32) -> (i32, i32) {
    %c0_i32 = arith.constant 0 : i32
    %c0_i32_0 = arith.constant 0 : i32
    %c0_i32_1 = arith.constant 0 : i32
    return %c0_i32, %c0_i32_0 : i32, i32
  }
  func.func @transform_4(%arg0: i32) -> (i32, i32) {
    %c0_i32 = arith.constant 0 : i32
    %c0_i32_0 = arith.constant 0 : i32
    return %c0_i32, %arg0 : i32, i32
  }
}

</mosaic_0001>

<llo_original>
// kernel: discriminator_forward.1
$region0: #{discriminator_forward.1}
  #allocation0 [shape = 'u32[]', space=smem, size = 0x4, offset = 0x4, fixed_abs, tag = 'smem constant byte address 0x4 - core index']
  #allocation1 [shape = 'u32[144,128]{1,0:T(1,128)}', space=vmem, size = 0x12000, scoped, tag = 'internal scratch']
  %s0 = inlined_call_operand.vmem [shape: s32[1,128], index: 0, kind: input, shape index: {}]
  %s1 = inlined_call_operand.vmem [shape: s32[1,128], index: 1, kind: input, shape index: {}]
  %s2 = inlined_call_operand.vmem [shape: f32[32,64], index: 2, kind: input, shape index: {}]
  %s3 = inlined_call_operand.vmem [shape: f32[64,1], index: 3, kind: input, shape index: {}]
  %s4 = inlined_call_operand.vmem [shape: f32[1,128], index: 4, kind: output, shape index: {}]
  %s5 = sld [smem:[#allocation0]]
  $region26: #{discriminator_forward.1} parent=0
    _
  %s7 = ssub.s32 1, %s5
  %s8 = scalar_select 0, %s7, %s5
  // Predicated region
  $region2: #{discriminator_forward.1} parent=0 // pred_check
    _
  $region3: #{discriminator_forward.1} parent=0 // pred_check_branch
    %10 = sbr.rel (0) target = $region5
  $region4: #{discriminator_forward.1} parent=0 // pred_region
    _
  $region5: #{discriminator_forward.1} parent=0 // pred_fallthru
    _
  // Predicated region
  $region6: #{discriminator_forward.1} parent=0 // pred_check
    _
  $region7: #{discriminator_forward.1} parent=0 // pred_check_branch
    %12 = sbr.rel (0) target = $region9
  $region8: #{discriminator_forward.1} parent=0 // pred_region
    _
  $region9: #{discriminator_forward.1} parent=0 // pred_fallthru
    _
  // Predicated region
  $region10: #{discriminator_forward.1} parent=0 // pred_check
    _
  $region11: #{discriminator_forward.1} parent=0 // pred_check_branch
    %14 = sbr.rel (0) target = $region13
  $region12: #{discriminator_forward.1} parent=0 // pred_region
    _
  $region13: #{discriminator_forward.1} parent=0 // pred_fallthru
    _
  // Predicated region
  $region14: #{discriminator_forward.1} parent=0 // pred_check
    _
  $region15: #{discriminator_forward.1} parent=0 // pred_check_branch
    %16 = sbr.rel (0) target = $region17
  $region16: #{discriminator_forward.1} parent=0 // pred_region
    _
  $region17: #{discriminator_forward.1} parent=0 // pred_fallthru
    _
  %v17 = vld [vmem:[%s2] sm:$0xff]
  %v18 = vld [vmem:[%s2 + $0x8] sm:$0xff]
  %v19 = vld [vmem:[%s2 + $0x10] sm:$0xff]
  %v20 = vld [vmem:[%s2 + $0x18] sm:$0xff]
  %v21 = vlaneseq
  %v22 = vshrl.u32 %v21, 7
  %v23 = vadd.s32 %v22, 8
  %v24 = vadd.s32 %v22, 16
  %v25 = vadd.s32 %v22, 24
  %v26 = vadd.s32 %v22, 32
  %v27 = vadd.s32 %v22, 40
  %v28 = vadd.s32 %v22, 48
  %v29 = vadd.s32 %v22, 56
  %v30 = vld [vmem:[%s0] sm:$0x1]
  %v31 = vlaneseq
  %v32 = vshrl.u32 %v31, 7
  %v33 = vsub.s32 0, %v32
  %v34 = vrot.slane %v30, %v33
  %vm35 = vcmp.eq.s32.totalorder %v22, %v34
  %vm36 = vcmp.eq.s32.totalorder %v23, %v34
  %vm37 = vcmp.eq.s32.totalorder %v24, %v34
  %vm38 = vcmp.eq.s32.totalorder %v25, %v34
  %vm39 = vcmp.eq.s32.totalorder %v26, %v34
  %vm40 = vcmp.eq.s32.totalorder %v27, %v34
  %vm41 = vcmp.eq.s32.totalorder %v28, %v34
  %vm42 = vcmp.eq.s32.totalorder %v29, %v34
  %v43 = vsel %vm35, 1, 0
  %v44 = vsel %vm36, 1, 0
  %v45 = vsel %vm37, 1, 0
  %v46 = vsel %vm38, 1, 0
  %v47 = vsel %vm39, 1, 0
  %v48 = vsel %vm40, 1, 0
  %v49 = vsel %vm41, 1, 0
  %v50 = vsel %vm42, 1, 0
  %v51 = vcvt.s32.f32 %v43
  %v52 = vcvt.s32.f32 %v44
  %v53 = vcvt.s32.f32 %v45
  %v54 = vcvt.s32.f32 %v46
  %v55 = vcvt.s32.f32 %v47
  %v56 = vcvt.s32.f32 %v48
  %v57 = vcvt.s32.f32 %v49
  %v58 = vcvt.s32.f32 %v50
  %v59 = vld [vmem:[%s1] sm:$0x1]
  %v60 = vlaneseq
  %v61 = vshrl.u32 %v60, 7
  %v62 = vsub.s32 0, %v61
  %v63 = vrot.slane %v59, %v62
  %vm64 = vcmp.eq.s32.totalorder %v22, %v63
  %vm65 = vcmp.eq.s32.totalorder %v23, %v63
  %vm66 = vcmp.eq.s32.totalorder %v24, %v63
  %vm67 = vcmp.eq.s32.totalorder %v25, %v63
  %vm68 = vcmp.eq.s32.totalorder %v26, %v63
  %vm69 = vcmp.eq.s32.totalorder %v27, %v63
  %vm70 = vcmp.eq.s32.totalorder %v28, %v63
  %vm71 = vcmp.eq.s32.totalorder %v29, %v63
  %v72 = vsel %vm64, 1, 0
  %v73 = vsel %vm65, 1, 0
  %v74 = vsel %vm66, 1, 0
  %v75 = vsel %vm67, 1, 0
  %v76 = vsel %vm68, 1, 0
  %v77 = vsel %vm69, 1, 0
  %v78 = vsel %vm70, 1, 0
  %v79 = vsel %vm71, 1, 0
  %v80 = vcvt.s32.f32 %v72
  %v81 = vcvt.s32.f32 %v73
  %v82 = vcvt.s32.f32 %v74
  %v83 = vcvt.s32.f32 %v75
  %v84 = vcvt.s32.f32 %v76
  %v85 = vcvt.s32.f32 %v77
  %v86 = vcvt.s32.f32 %v78
  %v87 = vcvt.s32.f32 %v79
  %vm88 = vcmask 523264
  %v90 = vsel %vm88, %v17, 0
  %v93 = vsel %vm88, %v18, 0
  %v96 = vsel %vm88, %v19, 0
  %v99 = vsel %vm88, %v20, 0
  %101 = vmatprep.subr.mxu0 0.0
  %102 = vmatpush1.msra.mxu0 %v51
  %103 = vmatprep.subr.mxu0 0.0
  %104 = vmatpush1.msra.mxu0 %v52
  %105 = vmatprep.subr.mxu0 0.0
  %106 = vmatpush1.msra.mxu0 %v53
  %107 = vmatprep.subr.mxu0 0.0
  %108 = vmatpush1.msra.mxu0 %v54
  %109 = vmatprep.subr.mxu0 0.0
  %110 = vmatpush1.msra.mxu0 %v55
  %111 = vmatprep.subr.mxu0 0.0
  %112 = vmatpush1.msra.mxu0 %v56
  %113 = vmatprep.subr.mxu0 0.0
  %114 = vmatpush1.msra.mxu0 %v57
  %115 = vmatprep.subr.mxu0 0.0
  %116 = vmatpush1.msra.mxu0 %v58
  %117 = vmatprep.subr.mxu0 0.0
  %118 = vmatpush1.msra.mxu0 0.0
  %119 = vmatprep.subr.mxu0 0.0
  %120 = vmatpush1.msra.mxu0 0.0
  %121 = vmatprep.subr.mxu0 0.0
  %122 = vmatpush1.msra.mxu0 0.0
  %123 = vmatprep.subr.mxu0 0.0
  %124 = vmatpush1.msra.mxu0 0.0
  %125 = vmatprep.subr.mxu0 0.0
  %126 = vmatpush1.msra.mxu0 0.0
  %127 = vmatprep.subr.mxu0 0.0
  %128 = vmatpush1.msra.mxu0 0.0
  %129 = vmatprep.subr.mxu0 0.0
  %130 = vmatpush1.msra.mxu0 0.0
  %131 = vmatprep.subr.mxu0 0.0
  %132 = vmatpush1.msra.mxu0 0.0
  %133 = vmatprep.subr.mxu0 0.0
  %134 = vmatpush1.msra.mxu0 0.0
  %135 = vmatprep.subr.mxu0 0.0
  %136 = vmatpush1.msra.mxu0 0.0
  %137 = vmatprep.subr.mxu0 0.0
  %138 = vmatpush1.msra.mxu0 0.0
  %139 = vmatprep.subr.mxu0 0.0
  %140 = vmatpush1.msra.mxu0 0.0
  %141 = vmatprep.subr.mxu0 0.0
  %142 = vmatpush1.msra.mxu0 0.0
  %143 = vmatprep.subr.mxu0 0.0
  %144 = vmatpush1.msra.mxu0 0.0
  %145 = vmatprep.subr.mxu0 0.0
  %146 = vmatpush1.msra.mxu0 0.0
  %147 = vmatprep.subr.mxu0 0.0
  %148 = vmatpush1.msra.mxu0 0.0
  %149 = vmatprep.subr.mxu0 0.0
  %150 = vmatpush1.msra.mxu0 0.0
  %151 = vmatprep.subr.mxu0 0.0
  %152 = vmatpush1.msra.mxu0 0.0
  %153 = vmatprep.subr.mxu0 0.0
  %154 = vmatpush1.msra.mxu0 0.0
  %155 = vmatprep.subr.mxu0 0.0
  %156 = vmatpush1.msra.mxu0 0.0
  %157 = vmatprep.subr.mxu0 0.0
  %158 = vmatpush1.msra.mxu0 0.0
  %159 = vmatprep.subr.mxu0 0.0
  %160 = vmatpush1.msra.mxu0 0.0
  %161 = vmatprep.subr.mxu0 0.0
  %162 = vmatpush1.msra.mxu0 0.0
  %163 = vmatprep.subr.mxu0 0.0
  %164 = vmatpush1.msra.mxu0 0.0
  %165 = vmatprep.mubr.f32.mxu0 0.0
  %166 = vmatmul.mubr.f32.gmra.mrb[0].mxu0 %v90
  %v167 = vpop.f32.mrb[0].mxu0
  %v168 = vadd.f32 0.0, %v167
  %v169 = vpop.f32.mrb[0].mxu0
  %170 = vmatprep.mubr.f32.mxu0 0.0
  %171 = vmatmul.mubr.f32.gmra.mrb[0].mxu0 %v93
  %v172 = vpop.f32.mrb[0].mxu0
  %v173 = vadd.f32 0.0, %v172
  %v174 = vpop.f32.mrb[0].mxu0
  %175 = vmatprep.mubr.f32.mxu0 0.0
  %176 = vmatmul.mubr.f32.gmra.mrb[0].mxu0 %v96
  %v177 = vpop.f32.mrb[0].mxu0
  %v178 = vadd.f32 0.0, %v177
  %v179 = vpop.f32.mrb[0].mxu0
  %180 = vmatprep.mubr.f32.mxu0 0.0
  %181 = vmatmul.mubr.f32.gmra.mrb[0].mxu0 %v99
  %v182 = vpop.f32.mrb[0].mxu0
  %v183 = vadd.f32 0.0, %v182
  %v184 = vpop.f32.mrb[0].mxu0
  %185 = vdwg.mxu0
  %186 = vmatprep.subr.mxu0 0.0
  %187 = vmatpush1.msra.mxu0 %v80
  %188 = vmatprep.subr.mxu0 0.0
  %189 = vmatpush1.msra.mxu0 %v81
  %190 = vmatprep.subr.mxu0 0.0
  %191 = vmatpush1.msra.mxu0 %v82
  %192 = vmatprep.subr.mxu0 0.0
  %193 = vmatpush1.msra.mxu0 %v83
  %194 = vmatprep.subr.mxu0 0.0
  %195 = vmatpush1.msra.mxu0 %v84
  %196 = vmatprep.subr.mxu0 0.0
  %197 = vmatpush1.msra.mxu0 %v85
  %198 = vmatprep.subr.mxu0 0.0
  %199 = vmatpush1.msra.mxu0 %v86
  %200 = vmatprep.subr.mxu0 0.0
  %201 = vmatpush1.msra.mxu0 %v87
  %202 = vmatprep.subr.mxu0 0.0
  %203 = vmatpush1.msra.mxu0 0.0
  %204 = vmatprep.subr.mxu0 0.0
  %205 = vmatpush1.msra.mxu0 0.0
  %206 = vmatprep.subr.mxu0 0.0
  %207 = vmatpush1.msra.mxu0 0.0
  %208 = vmatprep.subr.mxu0 0.0
  %209 = vmatpush1.msra.mxu0 0.0
  %210 = vmatprep.subr.mxu0 0.0
  %211 = vmatpush1.msra.mxu0 0.0
  %212 = vmatprep.subr.mxu0 0.0
  %213 = vmatpush1.msra.mxu0 0.0
  %214 = vmatprep.subr.mxu0 0.0
  %215 = vmatpush1.msra.mxu0 0.0
  %216 = vmatprep.subr.mxu0 0.0
  %217 = vmatpush1.msra.mxu0 0.0
  %218 = vmatprep.subr.mxu0 0.0
  %219 = vmatpush1.msra.mxu0 0.0
  %220 = vmatprep.subr.mxu0 0.0
  %221 = vmatpush1.msra.mxu0 0.0
  %222 = vmatprep.subr.mxu0 0.0
  %223 = vmatpush1.msra.mxu0 0.0
  %224 = vmatprep.subr.mxu0 0.0
  %225 = vmatpush1.msra.mxu0 0.0
  %226 = vmatprep.subr.mxu0 0.0
  %227 = vmatpush1.msra.mxu0 0.0
  %228 = vmatprep.subr.mxu0 0.0
  %229 = vmatpush1.msra.mxu0 0.0
  %230 = vmatprep.subr.mxu0 0.0
  %231 = vmatpush1.msra.mxu0 0.0
  %232 = vmatprep.subr.mxu0 0.0
  %233 = vmatpush1.msra.mxu0 0.0
  %234 = vmatprep.subr.mxu0 0.0
  %235 = vmatpush1.msra.mxu0 0.0
  %236 = vmatprep.subr.mxu0 0.0
  %237 = vmatpush1.msra.mxu0 0.0
  %238 = vmatprep.subr.mxu0 0.0
  %239 = vmatpush1.msra.mxu0 0.0
  %240 = vmatprep.subr.mxu0 0.0
  %241 = vmatpush1.msra.mxu0 0.0
  %242 = vmatprep.subr.mxu0 0.0
  %243 = vmatpush1.msra.mxu0 0.0
  %244 = vmatprep.subr.mxu0 0.0
  %245 = vmatpush1.msra.mxu0 0.0
  %246 = vmatprep.subr.mxu0 0.0
  %247 = vmatpush1.msra.mxu0 0.0
  %248 = vmatprep.subr.mxu0 0.0
  %249 = vmatpush1.msra.mxu0 0.0
  %250 = vmatprep.mubr.f32.mxu0 0.0
  %251 = vmatmul.mubr.f32.gmra.mrb[0].mxu0 %v90
  %v252 = vpop.f32.mrb[0].mxu0
  %v253 = vadd.f32 0.0, %v252
  %v254 = vpop.f32.mrb[0].mxu0
  %255 = vmatprep.mubr.f32.mxu0 0.0
  %256 = vmatmul.mubr.f32.gmra.mrb[0].mxu0 %v93
  %v257 = vpop.f32.mrb[0].mxu0
  %v258 = vadd.f32 0.0, %v257
  %v259 = vpop.f32.mrb[0].mxu0
  %260 = vmatprep.mubr.f32.mxu0 0.0
  %261 = vmatmul.mubr.f32.gmra.mrb[0].mxu0 %v96
  %v262 = vpop.f32.mrb[0].mxu0
  %v263 = vadd.f32 0.0, %v262
  %v264 = vpop.f32.mrb[0].mxu0
  %265 = vmatprep.mubr.f32.mxu0 0.0
  %266 = vmatmul.mubr.f32.gmra.mrb[0].mxu0 %v99
  %v267 = vpop.f32.mrb[0].mxu0
  %v268 = vadd.f32 0.0, %v267
  %v269 = vpop.f32.mrb[0].mxu0
  %270 = vdwg.mxu0
  %v271 = vld [vmem:[%s3] sm:$0xff]
  %v272 = vld [vmem:[%s3 + $0x8] sm:$0xff]
  %v273 = vld [vmem:[%s3 + $0x10] sm:$0xff]
  %v274 = vld [vmem:[%s3 + $0x18] sm:$0xff]
  %v275 = vld [vmem:[%s3 + $0x20] sm:$0xff]
  %v276 = vld [vmem:[%s3 + $0x28] sm:$0xff]
  %v277 = vld [vmem:[%s3 + $0x30] sm:$0xff]
  %v278 = vld [vmem:[%s3 + $0x38] sm:$0xff]
  %280 = vset.pattern.permute.xlu0 0
  %281 = vperm.xlu0 %280, %v271
  %v282 = vpop.permute.xlu0 %281
  %285 = vset.pattern.permute.xlu0 0
  %286 = vperm.xlu0 %285, %v272
  %v287 = vpop.permute.xlu0 %286
  %290 = vset.pattern.permute.xlu0 0
  %291 = vperm.xlu0 %290, %v273
  %v292 = vpop.permute.xlu0 %291
  %295 = vset.pattern.permute.xlu0 0
  %296 = vperm.xlu0 %295, %v274
  %v297 = vpop.permute.xlu0 %296
  %300 = vset.pattern.permute.xlu0 0
  %301 = vperm.xlu0 %300, %v275
  %v302 = vpop.permute.xlu0 %301
  %305 = vset.pattern.permute.xlu0 0
  %306 = vperm.xlu0 %305, %v276
  %v307 = vpop.permute.xlu0 %306
  %310 = vset.pattern.permute.xlu0 0
  %311 = vperm.xlu0 %310, %v277
  %v312 = vpop.permute.xlu0 %311
  %315 = vset.pattern.permute.xlu0 0
  %316 = vperm.xlu0 %315, %v278
  %v317 = vpop.permute.xlu0 %316
  %v319 = vmul.f32 %v80, %v282
  %v320 = vmul.f32 %v81, %v287
  %v321 = vmul.f32 %v82, %v292
  %v322 = vmul.f32 %v83, %v297
  %v323 = vmul.f32 %v84, %v302
  %v324 = vmul.f32 %v85, %v307
  %v325 = vmul.f32 %v86, %v312
  %v326 = vmul.f32 %v87, %v317
  %v327 = vadd.f32 %v319, %v320
  %v328 = vadd.f32 %v327, %v321
  %v329 = vadd.f32 %v328, %v322
  %v330 = vadd.f32 %v329, %v323
  %v331 = vadd.f32 %v330, %v324
  %v332 = vadd.f32 %v331, %v325
  %v333 = vadd.f32 %v332, %v326
  %v334 = vrot.slane %v333, 4
  %v335 = vadd.f32 %v333, %v334
  %v336 = vrot.slane %v335, 2
  %v337 = vadd.f32 %v335, %v336
  %v338 = vrot.slane %v337, 1
  %v339 = vadd.f32 %v337, %v338
  %v340 = vmul.f32 %v168, %v253
  %v341 = vmul.f32 %v173, %v258
  %v342 = vmul.f32 %v178, %v263
  %v343 = vmul.f32 %v183, %v268
  %v344 = vadd.f32 %v340, %v341
  %v345 = vadd.f32 %v344, %v342
  %v346 = vadd.f32 %v345, %v343
  %v347 = vrot.slane %v346, 4
  %v348 = vadd.f32 %v346, %v347
  %v349 = vrot.slane %v348, 2
  %v350 = vadd.f32 %v348, %v349
  %v351 = vrot.slane %v350, 1
  %v352 = vadd.f32 %v350, %v351
  %v353 = vadd.f32 %v352, %v339
  %v354 = vxor.u32 %v353, 2147483648
  %v355 = vmul.f32 %v354, 1.442695
  %v356 = vpow.pop %v355
  %v357 = vadd.f32 %v356, 1.0
  %v358 = vrcp.pop %v357
  %v359 = vmul.f32 1.0, %v358
  %360 = vst [vmem:[%s4] sm:$0x1] %v359
  // Predicated region
  $region18: #{discriminator_forward.1} parent=0 // pred_check
    _
  $region19: #{discriminator_forward.1} parent=0 // pred_check_branch
    %362 = sbr.rel (0) target = $region21
  $region20: #{discriminator_forward.1} parent=0 // pred_region
    _
  $region21: #{discriminator_forward.1} parent=0 // pred_fallthru
    _
  // Predicated region
  $region22: #{discriminator_forward.1} parent=0 // pred_check
    _
  $region23: #{discriminator_forward.1} parent=0 // pred_check_branch
    %364 = sbr.rel (0) target = $region25
  $region24: #{discriminator_forward.1} parent=0 // pred_region
    _
  $region25: #{discriminator_forward.1} parent=0 // pred_fallthru
    _

</llo_original>
